<compile_context>
chip_gen: v6e
topology: v6e:2x2x1
jax: 0.10.0
libtpu: 0.0.40
codegen_flags: <defaults>
</compile_context>

<pallas_src>
import jax
import jax.numpy as jnp
from jax.experimental import pallas as pl
from jax.experimental.pallas import tpu as pltpu

LANE = 128
SUBLANE = 8


def _round_up(x, m):
    return ((x + m - 1) // m) * m


# ---------------------------------------------------------------------------
# Kernels
# ---------------------------------------------------------------------------

def _dynamic_step_kernel(act_ref, lat_ref, w1_ref, embf_ref, w2_ref, b2_ref,
                         out_ref):
    """One dynamics step. Shapes (all padded to 128 lanes on feature axes):
       act: (B, 1) i32   lat: (B, L)        w1: (L, HP)
       embf: (AP, HP)    w2: (HP, LP)       b2: (1, LP)     out: (B, LP)
    """
    B = lat_ref.shape[0]
    AP = embf_ref.shape[0]
    cdt = w1_ref.dtype  # matmul operand dtype (f32 or bf16)

    # In-kernel embedding "gather": exact one-hot (B, AP) built from a 2-D iota.
    onehot = (act_ref[...] ==
              jax.lax.broadcasted_iota(jnp.int32, (B, AP), 1)).astype(cdt)

    h = jnp.dot(lat_ref[...].astype(cdt), w1_ref[...],
                preferred_element_type=jnp.float32)
    h += jnp.dot(onehot, embf_ref[...], preferred_element_type=jnp.float32)
    h = jnp.maximum(h, 0.0)                       # ReLU (b1 folded into embf)
    y = jnp.dot(h.astype(cdt), w2_ref[...],
                preferred_element_type=jnp.float32) + b2_ref[...]
    out_ref[...] = jnp.tanh(y)


def _dynamic_rollout_kernel(acts_ref, lat0_ref, w1_ref, embf_ref, w2_ref,
                            b2_ref, out_ref, lat_scr):
    """K fused dynamics steps (grid over steps). Weights have constant
    index_maps so they are DMA'd into VMEM once; the latent recurs in a VMEM
    scratch buffer. Per-step kernel views:
       acts: (B, 1) i32  lat0: (B, LP)  w1: (LP, HP)  embf: (AP, HP)
       w2: (HP, LP)      b2: (1, LP)    out: (B, LP)  lat_scr: (B, LP) f32
    """
    B, _ = lat_scr.shape
    AP = embf_ref.shape[0]
    cdt = w1_ref.dtype

    @pl.when(pl.program_id(0) == 0)
    def _():
        lat_scr[...] = lat0_ref[...]

    onehot = (acts_ref[...] ==
              jax.lax.broadcasted_iota(jnp.int32, (B, AP), 1)).astype(cdt)

    h = jnp.dot(lat_scr[...].astype(cdt), w1_ref[...],
                preferred_element_type=jnp.float32)
    h += jnp.dot(onehot, embf_ref[...], preferred_element_type=jnp.float32)
    h = jnp.maximum(h, 0.0)
    y = jnp.dot(h.astype(cdt), w2_ref[...],
                preferred_element_type=jnp.float32) + b2_ref[...]
    new_lat = jnp.tanh(y)
    lat_scr[...] = new_lat
    out_ref[...] = new_lat


# ---------------------------------------------------------------------------
# Param preparation (done ONCE, hoisted out of the per-call path)
# ---------------------------------------------------------------------------

def prepare_params(params, latent_size, compute_dtype=jnp.float32):
    """Fold the embedding lookup into a fused table and zero-pad every feature
    axis to 128 lanes. `compute_dtype=jnp.bfloat16` selects the bf16 MXU path
    (v6e/v7x); accumulation and elementwise math remain f32 regardless."""
    emb, w1, b1, w2, b2 = (params["emb"], params["w1"], params["b1"],
                           params["w2"], params["b2"])
    L = latent_size
    A, _ = emb.shape
    H = w1.shape[1]

    HP = _round_up(H, LANE)
    LP = _round_up(L, LANE)
    AP = _round_up(A, SUBLANE)

    w1_lat = w1[:L, :]                                   # (L, H)
    w1_act = w1[L:, :]                                   # (E, H)
    emb_fused = emb @ w1_act + b1[None, :]               # (A, H), b1 folded in

    f32 = jnp.float32
    w1_lat_p = jnp.zeros((L, HP), f32).at[:, :H].set(w1_lat)
    w1_lat_padK = jnp.zeros((LP, HP), f32).at[:L, :H].set(w1_lat)  # rollout: K=LP
    emb_fused_p = jnp.zeros((AP, HP), f32).at[:A, :H].set(emb_fused)
    w2_p = jnp.zeros((HP, LP), f32).at[:H, :L].set(w2)
    b2_p = jnp.zeros((1, LP), f32).at[0, :L].set(b2)

    return {
        "w1_lat": w1_lat_p.astype(compute_dtype),
        "w1_lat_padK": w1_lat_padK.astype(compute_dtype),
        "emb_fused": emb_fused_p.astype(compute_dtype),
        "w2": w2_p.astype(compute_dtype),
        "b2": b2_p,                        # bias added in f32 after accumulation
        "latent_size": L,
        "hidden_pad": HP,
        "latent_pad": LP,
        "actions_pad": AP,
    }


# ---------------------------------------------------------------------------
# Wrappers
# ---------------------------------------------------------------------------

def dynamic_network_forward(latent_state, action, prep):
    """Single dynamics step (matches DynamicNetwork.forward).
    latent_state: (B, L) f32, action: (B,) int -> (B, L) f32."""
    B, L = latent_state.shape
    HP, LP, AP = prep["hidden_pad"], prep["latent_pad"], prep["actions_pad"]
    act = action.astype(jnp.int32).reshape(B, 1)

    out = pl.pallas_call(
        _dynamic_step_kernel,
        out_shape=jax.ShapeDtypeStruct((B, LP), jnp.float32),
        in_specs=[
            pl.BlockSpec((B, 1), lambda: (0, 0)),
            pl.BlockSpec((B, L), lambda: (0, 0)),
            pl.BlockSpec((L, HP), lambda: (0, 0)),
            pl.BlockSpec((AP, HP), lambda: (0, 0)),
            pl.BlockSpec((HP, LP), lambda: (0, 0)),
            pl.BlockSpec((1, LP), lambda: (0, 0)),
        ],
        out_specs=pl.BlockSpec((B, LP), lambda: (0, 0)),
    )(act, latent_state, prep["w1_lat"], prep["emb_fused"], prep["w2"],
      prep["b2"])
    return out[:, :prep["latent_size"]]


def dynamic_network_rollout(latent_state, actions, prep):
    """K fused dynamics steps in ONE pallas_call (weights stay in VMEM).
    latent_state: (B, L) f32, actions: (K, B) int -> (K, B, L) latents."""
    K, B = actions.shape
    L = prep["latent_size"]
    HP, LP, AP = prep["hidden_pad"], prep["latent_pad"], prep["actions_pad"]

    lat0 = jnp.zeros((B, LP), jnp.float32).at[:, :L].set(latent_state)
    acts = actions.astype(jnp.int32).reshape(K, B, 1)

    out = pl.pallas_call(
        _dynamic_rollout_kernel,
        out_shape=jax.ShapeDtypeStruct((K, B, LP), jnp.float32),
        grid=(K,),
        in_specs=[
            pl.BlockSpec((None, B, 1), lambda k: (k, 0, 0)),
            pl.BlockSpec((B, LP), lambda k: (0, 0)),
            pl.BlockSpec((LP, HP), lambda k: (0, 0)),
            pl.BlockSpec((AP, HP), lambda k: (0, 0)),
            pl.BlockSpec((HP, LP), lambda k: (0, 0)),
            pl.BlockSpec((1, LP), lambda k: (0, 0)),
        ],
        out_specs=pl.BlockSpec((None, B, LP), lambda k: (k, 0, 0)),
        scratch_shapes=[pltpu.VMEM((B, LP), jnp.float32)],
        compiler_params=pltpu.CompilerParams(
            dimension_semantics=("arbitrary",)),
    )(acts, lat0, prep["w1_lat_padK"], prep["emb_fused"], prep["w2"],
      prep["b2"])
    return out[..., :L]


# ---------------------------------------------------------------------------
# Init + reference + test
# ---------------------------------------------------------------------------

def init_params(key, num_actions, embedding_dim, latent_size, hidden_size):
    """Mirrors nn.Embedding (N(0,1)) and nn.Linear (uniform +/- 1/sqrt(fan_in))
    parameter shapes."""
    k_emb, k_w1, k_b1, k_w2, k_b2 = jax.random.split(key, 5)
    d_in = latent_size + embedding_dim
    bound1 = 1.0 / jnp.sqrt(d_in)
    bound2 = 1.0 / jnp.sqrt(hidden_size)
    return {
        "emb": jax.random.normal(k_emb, (num_actions, embedding_dim), jnp.float32),
        "w1": jax.random.uniform(k_w1, (d_in, hidden_size), jnp.float32, -bound1, bound1),
        "b1": jax.random.uniform(k_b1, (hidden_size,), jnp.float32, -bound1, bound1),
        "w2": jax.random.uniform(k_w2, (hidden_size, latent_size), jnp.float32, -bound2, bound2),
        "b2": jax.random.uniform(k_b2, (latent_size,), jnp.float32, -bound2, bound2),
    }


def reference_step(latent, action, params):
    emb = jnp.take(params["emb"], action, axis=0)
    x = jnp.concatenate([latent, emb], axis=-1)
    h = jnp.maximum(x @ params["w1"] + params["b1"], 0.0)
    return jnp.tanh(h @ params["w2"] + params["b2"])


if __name__ == "__main__":
    batch = 8
    num_actions = 6
    embedding_dim = 16
    latent_size = 32
    hidden_size = 64
    rollout_steps = 5

    key = jax.random.PRNGKey(0)
    k_params, k_latent, k_action, k_roll = jax.random.split(key, 4)

    params = init_params(k_params, num_actions, embedding_dim, latent_size,
                         hidden_size)
    latent_state = jax.random.normal(k_latent, (batch, latent_size), jnp.float32)
    action = jax.random.randint(k_action, (batch,), 0, num_actions, jnp.int32)

    prep = prepare_params(params, latent_size)                 # f32 MXU path

    # --- single-step forward (matches DynamicNetwork.forward) ---
    out = jax.block_until_ready(dynamic_network_forward(latent_state, action, prep))
    ref = reference_step(latent_state, action, params)
    assert out.shape == (batch, latent_size)
    assert jnp.allclose(out, ref, atol=1e-5, rtol=1e-5)

    # --- fused multi-step rollout (weights resident in VMEM across steps) ---
    actions_k = jax.random.randint(k_roll, (rollout_steps, batch), 0,
                                   num_actions, jnp.int32)
    outs = jax.block_until_ready(
        dynamic_network_rollout(latent_state, actions_k, prep))
    assert outs.shape == (rollout_steps, batch, latent_size)
    lat_ref = latent_state
    for k in range(rollout_steps):
        lat_ref = reference_step(lat_ref, actions_k[k], params)
        assert jnp.allclose(outs[k], lat_ref, atol=1e-4, rtol=1e-4)

    # --- optional bf16 MXU-operand path (v6e/v7x fast path; f32 accumulation) ---
    prep_bf16 = prepare_params(params, latent_size, compute_dtype=jnp.bfloat16)
    out_bf16 = jax.block_until_ready(
        dynamic_network_forward(latent_state, action, prep_bf16))
    assert jnp.allclose(out_bf16, ref, atol=5e-2)

    print("KERNEL_OK")
</pallas_src>

<mosaic_0001>
module attributes {stable_mosaic.version = 11 : i64} {
  func.func @_dynamic_step_kernel(%arg0: memref<8x1xi32, #tpu.memory_space<vmem>>, %arg1: memref<8x32xf32, #tpu.memory_space<vmem>>, %arg2: memref<32x128xf32, #tpu.memory_space<vmem>>, %arg3: memref<8x128xf32, #tpu.memory_space<vmem>>, %arg4: memref<128x128xf32, #tpu.memory_space<vmem>>, %arg5: memref<1x128xf32, #tpu.memory_space<vmem>>, %arg6: memref<8x128xf32, #tpu.memory_space<vmem>>) attributes {dimension_semantics = [], scalar_prefetch = 0 : i64, scratch_operands = 0 : i64, tpu.core_type = #tpu.core_type<tc>} {
    %c0 = arith.constant 0 : index
    %c0_0 = arith.constant 0 : index
    %0 = vector.load %arg0[%c0, %c0_0] : memref<8x1xi32, #tpu.memory_space<vmem>>, vector<8x1xi32>
    %1 = tpu.iota {dimensions = array<i32: 1>} : vector<8x8xi32>
    %2 = vector.broadcast %0 : vector<8x1xi32> to vector<8x8xi32>
    %3 = arith.cmpi eq, %2, %1 : vector<8x8xi32>
    %4 = arith.extui %3 : vector<8x8xi1> to vector<8x8xi32>
    %5 = arith.sitofp %4 : vector<8x8xi32> to vector<8x8xf32>
    %c0_1 = arith.constant 0 : index
    %c0_2 = arith.constant 0 : index
    %6 = vector.load %arg1[%c0_1, %c0_2] : memref<8x32xf32, #tpu.memory_space<vmem>>, vector<8x32xf32>
    %c0_3 = arith.constant 0 : index
    %c0_4 = arith.constant 0 : index
    %7 = vector.load %arg2[%c0_3, %c0_4] : memref<32x128xf32, #tpu.memory_space<vmem>>, vector<32x128xf32>
    %cst = arith.constant dense<0.000000e+00> : vector<8x128xf32>
    %8 = tpu.matmul %6, %7, %cst {dimension_numbers = #tpu.dot_dimension_numbers<[1], [0], [0], [1], [0, 0, 1, 1], [], []>} : vector<8x32xf32>, vector<32x128xf32>, vector<8x128xf32> -> vector<8x128xf32>
    %c0_5 = arith.constant 0 : index
    %c0_6 = arith.constant 0 : index
    %9 = vector.load %arg3[%c0_5, %c0_6] : memref<8x128xf32, #tpu.memory_space<vmem>>, vector<8x128xf32>
    %cst_7 = arith.constant dense<0.000000e+00> : vector<8x128xf32>
    %10 = tpu.matmul %5, %9, %cst_7 {dimension_numbers = #tpu.dot_dimension_numbers<[1], [0], [0], [1], [0, 0, 1, 1], [], []>} : vector<8x8xf32>, vector<8x128xf32>, vector<8x128xf32> -> vector<8x128xf32>
    %11 = arith.addf %8, %10 : vector<8x128xf32>
    %cst_8 = arith.constant 0.000000e+00 : f32
    %12 = vector.broadcast %cst_8 : f32 to vector<8x128xf32>
    %13 = arith.maximumf %11, %12 : vector<8x128xf32>
    %c0_9 = arith.constant 0 : index
    %c0_10 = arith.constant 0 : index
    %14 = vector.load %arg4[%c0_9, %c0_10] : memref<128x128xf32, #tpu.memory_space<vmem>>, vector<128x128xf32>
    %cst_11 = arith.constant dense<0.000000e+00> : vector<8x128xf32>
    %15 = tpu.matmul %13, %14, %cst_11 {dimension_numbers = #tpu.dot_dimension_numbers<[1], [0], [0], [1], [0, 0, 1, 1], [], []>} : vector<8x128xf32>, vector<128x128xf32>, vector<8x128xf32> -> vector<8x128xf32>
    %c0_12 = arith.constant 0 : index
    %c0_13 = arith.constant 0 : index
    %16 = vector.load %arg5[%c0_12, %c0_13] : memref<1x128xf32, #tpu.memory_space<vmem>>, vector<1x128xf32>
    %17 = vector.broadcast %16 : vector<1x128xf32> to vector<8x128xf32>
    %18 = arith.addf %15, %17 : vector<8x128xf32>
    %19 = math.tanh %18 : vector<8x128xf32>
    %c0_14 = arith.constant 0 : index
    %c0_15 = arith.constant 0 : index
    %20 = vector.load %arg6[%c0_14, %c0_15] : memref<8x128xf32, #tpu.memory_space<vmem>>, vector<8x128xf32>
    tpu.vector_store %arg6[%c0_14, %c0_15], %19 {strides = array<i32>} : memref<8x128xf32, #tpu.memory_space<vmem>>, vector<8x128xf32>,
    return
  }
}

</mosaic_0001>

<llo_original>
// kernel: tpu_custom_call.1
$region0: #{tpu_custom_call.1}
  #allocation0 [shape = 'u32[]', space=smem, size = 0x4, offset = 0x4, fixed_abs, tag = 'smem constant byte address 0x4 - core index']
  #allocation1 [shape = 'u32[144,128]{1,0:T(1,128)}', space=vmem, size = 0x12000, scoped, tag = 'internal scratch']
  %s0 = inlined_call_operand.vmem [shape: s32[8,1], index: 0, kind: input, shape index: {}]
  %s1 = inlined_call_operand.vmem [shape: f32[8,32], index: 1, kind: input, shape index: {}]
  %s2 = inlined_call_operand.hbm [shape: f32[32,128], index: 2, kind: input, shape index: {}]
  %s3 = inlined_call_operand.hbm [shape: f32[8,128], index: 3, kind: input, shape index: {}]
  %s4 = inlined_call_operand.hbm [shape: f32[128,128], index: 4, kind: input, shape index: {}]
  %s5 = inlined_call_operand.vmem [shape: f32[1,128], index: 5, kind: input, shape index: {}]
  %s6 = inlined_call_operand.hbm [shape: f32[8,128], index: 6, kind: output, shape index: {}]
  %s7 = sld [smem:[#allocation0]]
  $region46: #{tpu_custom_call.1} parent=0
    _
  %s9 = ssub.s32 1, %s7
  %s10 = scalar_select 0, %s9, %s7
  $region1: #{tpu_custom_call.1} parent=0
    #allocation2 [shape = 'u8[16384]{0}', space=vmem, size = 0x4000, scoped, tag = 'input window, operand 2, single buffered']
    #allocation3 [shape = 's32[1]{0}', space=sflag, size = 0x4, scoped, tag = 'scoped memory for tpu_custom_call.1']
    #allocation4 [shape = 's32[1]{0}', space=sflag, size = 0x4, scoped, tag = 'scoped memory for tpu_custom_call.1']
    #allocation5 [shape = 'u8[4096]{0}', space=vmem, size = 0x1000, scoped, tag = 'input window, operand 3, single buffered']
    #allocation6 [shape = 's32[1]{0}', space=sflag, size = 0x4, scoped, tag = 'scoped memory for tpu_custom_call.1']
    #allocation7 [shape = 'u8[65536]{0}', space=vmem, size = 0x10000, scoped, tag = 'input window, operand 4, single buffered']
    #allocation8 [shape = 'u8[4096]{0}', space=vmem, size = 0x1000, scoped, tag = 'output window, operand 0, single buffered']
    %11 = vsyncpa [#allocation3], 0
    %12 = vsyncpa [#allocation6], 0
    %13 = vsyncpa [#allocation4], 0
    // Predicated region
    $region2: #{tpu_custom_call.1} parent=1 // pred_check
      _
    $region3: #{tpu_custom_call.1} parent=1 // pred_check_branch
      %15 = sbr.rel (0) target = $region5
    $region4: #{tpu_custom_call.1} parent=1 // pred_region
      _
    $region5: #{tpu_custom_call.1} parent=1 // pred_fallthru
      _
    // Predicated region
    $region6: #{tpu_custom_call.1} parent=1 // pred_check
      _
    $region7: #{tpu_custom_call.1} parent=1 // pred_check_branch
      %17 = sbr.rel (0) target = $region9
    $region8: #{tpu_custom_call.1} parent=1 // pred_region
      _
    $region9: #{tpu_custom_call.1} parent=1 // pred_fallthru
      _
    // Predicated region
    $region10: #{tpu_custom_call.1} parent=1 // pred_check
      _
    $region11: #{tpu_custom_call.1} parent=1 // pred_check_branch
      %19 = sbr.rel (0) target = $region13
    $region12: #{tpu_custom_call.1} parent=1 // pred_region
      %s21 = ssub.s32 512, 512
      %22 = vsyncadd [#allocation3], %s21
      %s23 = sshll.u32 [#allocation2], 4
      %s24 = int_to_ptr.vmem [resolvable:$true] %s23
      %29 = dma.hbm_to_vmem [thread:$0]  %s2, 512, %s24, [#allocation3], 128, 128, 8
    $region13: #{tpu_custom_call.1} parent=1 // pred_fallthru
      _
    // Predicated region
    $region14: #{tpu_custom_call.1} parent=1 // pred_check
      _
    $region15: #{tpu_custom_call.1} parent=1 // pred_check_branch
      %31 = sbr.rel (0) target = $region17
    $region16: #{tpu_custom_call.1} parent=1 // pred_region
      %s33 = ssub.s32 128, 128
      %34 = vsyncadd [#allocation6], %s33
      %s36 = sshll.u32 [#allocation5], 4
      %s37 = int_to_ptr.vmem [resolvable:$true] %s36
      %39 = dma.hbm_to_vmem [thread:$0]  %s3, 128, %s37, [#allocation6]
    $region17: #{tpu_custom_call.1} parent=1 // pred_fallthru
      _
    // Predicated region
    $region18: #{tpu_custom_call.1} parent=1 // pred_check
      _
    $region19: #{tpu_custom_call.1} parent=1 // pred_check_branch
      %41 = sbr.rel (0) target = $region21
    $region20: #{tpu_custom_call.1} parent=1 // pred_region
      %s43 = ssub.s32 2048, 2048
      %44 = vsyncadd [#allocation6], %s43
      %s45 = sshll.u32 [#allocation7], 4
      %s46 = int_to_ptr.vmem [resolvable:$true] %s45
      %51 = dma.hbm_to_vmem [thread:$0]  %s4, 2048, %s46, [#allocation6], 128, 128, 8
    $region21: #{tpu_custom_call.1} parent=1 // pred_fallthru
      _
    // Predicated region
    $region22: #{tpu_custom_call.1} parent=1 // pred_check
      _
    $region23: #{tpu_custom_call.1} parent=1 // pred_check_branch
      %53 = sbr.rel (0) target = $region25
    $region24: #{tpu_custom_call.1} parent=1 // pred_region
      _
    $region25: #{tpu_custom_call.1} parent=1 // pred_fallthru
      _
    // Predicated region
    $region26: #{tpu_custom_call.1} parent=1 // pred_check
      _
    $region27: #{tpu_custom_call.1} parent=1 // pred_check_branch
      %55 = sbr.rel (0) target = $region29
    $region28: #{tpu_custom_call.1} parent=1 // pred_region
      %56 = dma.done [#allocation3], 512
    $region29: #{tpu_custom_call.1} parent=1 // pred_fallthru
      _
    // Predicated region
    $region30: #{tpu_custom_call.1} parent=1 // pred_check
      _
    $region31: #{tpu_custom_call.1} parent=1 // pred_check_branch
      %58 = sbr.rel (0) target = $region33
    $region32: #{tpu_custom_call.1} parent=1 // pred_region
      %59 = dma.done [#allocation6], 128
    $region33: #{tpu_custom_call.1} parent=1 // pred_fallthru
      _
    // Predicated region
    $region34: #{tpu_custom_call.1} parent=1 // pred_check
      _
    $region35: #{tpu_custom_call.1} parent=1 // pred_check_branch
      %61 = sbr.rel (0) target = $region37
    $region36: #{tpu_custom_call.1} parent=1 // pred_region
      %62 = dma.done [#allocation6], 2048
    $region37: #{tpu_custom_call.1} parent=1 // pred_fallthru
      _
    %v63 = vld [vmem:[%s0] sm:$0xff]
    %v64 = vlaneseq
    %v65 = vand.u32 %v64, 127
    %66 = vset.pattern.permute.xlu0 0
    %67 = vperm.xlu0 %66, %v63
    %v68 = vpop.permute.xlu0 %67
    %vm69 = vcmp.eq.s32.totalorder %v68, %v65
    %v70 = vsel %vm69, 1, 0
    %v71 = vcvt.s32.f32 %v70
    %v72 = vld [vmem:[%s1] sm:$0xff]
    %v73 = vld [vmem:[#allocation2] sm:$0xff]
    %v74 = vld [vmem:[#allocation2 + $0x8] sm:$0xff]
    %v75 = vld [vmem:[#allocation2 + $0x10] sm:$0xff]
    %v76 = vld [vmem:[#allocation2 + $0x18] sm:$0xff]
    %v77 = vld [vmem:[#allocation5] sm:$0xff]
    %vm78 = vcmask 64512
    %v80 = vsel %vm78, %v71, 0
    %82 = vmatprep.subr.mxu0 0.0
    %83 = vmatpush1.msra.mxu0 0.0
    %84 = vmatprep.subr.mxu0 0.0
    %85 = vmatpush1.msra.mxu0 0.0
    %86 = vmatprep.subr.mxu0 0.0
    %87 = vmatpush1.msra.mxu0 0.0
    %88 = vmatprep.subr.mxu0 0.0
    %89 = vmatpush1.msra.mxu0 0.0
    %90 = vmatprep.subr.mxu0 0.0
    %91 = vmatpush1.msra.mxu0 0.0
    %92 = vmatprep.subr.mxu0 0.0
    %93 = vmatpush1.msra.mxu0 0.0
    %94 = vmatprep.subr.mxu0 0.0
    %95 = vmatpush1.msra.mxu0 0.0
    %96 = vmatprep.subr.mxu0 0.0
    %97 = vmatpush1.msra.mxu0 0.0
    %98 = vmatprep.subr.mxu0 0.0
    %99 = vmatpush1.msra.mxu0 0.0
    %100 = vmatprep.subr.mxu0 0.0
    %101 = vmatpush1.msra.mxu0 0.0
    %102 = vmatprep.subr.mxu0 0.0
    %103 = vmatpush1.msra.mxu0 0.0
    %104 = vmatprep.subr.mxu0 0.0
    %105 = vmatpush1.msra.mxu0 0.0
    %106 = vmatprep.subr.mxu0 0.0
    %107 = vmatpush1.msra.mxu0 0.0
    %108 = vmatprep.subr.mxu0 0.0
    %109 = vmatpush1.msra.mxu0 0.0
    %110 = vmatprep.subr.mxu0 0.0
    %111 = vmatpush1.msra.mxu0 0.0
    %112 = vmatprep.subr.mxu0 0.0
    %113 = vmatpush1.msra.mxu0 %v77
    %114 = vmatprep.subr.mxu0 0.0
    %115 = vmatpush2.msra.mxu0 0.0
    %116 = vmatprep.subr.mxu0 0.0
    %117 = vmatpush2.msra.mxu0 0.0
    %118 = vmatprep.subr.mxu0 0.0
    %119 = vmatpush2.msra.mxu0 0.0
    %120 = vmatprep.subr.mxu0 0.0
    %121 = vmatpush2.msra.mxu0 0.0
    %122 = vmatprep.subr.mxu0 0.0
    %123 = vmatpush2.msra.mxu0 0.0
    %124 = vmatprep.subr.mxu0 0.0
    %125 = vmatpush2.msra.mxu0 0.0
    %126 = vmatprep.subr.mxu0 0.0
    %127 = vmatpush2.msra.mxu0 0.0
    %128 = vmatprep.subr.mxu0 0.0
    %129 = vmatpush2.msra.mxu0 0.0
    %130 = vmatprep.subr.mxu0 0.0
    %131 = vmatpush2.msra.mxu0 0.0
    %132 = vmatprep.subr.mxu0 0.0
    %133 = vmatpush2.msra.mxu0 0.0
    %134 = vmatprep.subr.mxu0 0.0
    %135 = vmatpush2.msra.mxu0 0.0
    %136 = vmatprep.subr.mxu0 0.0
    %137 = vmatpush2.msra.mxu0 0.0
    %138 = vmatprep.subr.mxu0 0.0
    %139 = vmatpush2.msra.mxu0 0.0
    %140 = vmatprep.subr.mxu0 0.0
    %141 = vmatpush2.msra.mxu0 0.0
    %142 = vmatprep.subr.mxu0 0.0
    %143 = vmatpush2.msra.mxu0 0.0
    %144 = vmatprep.subr.mxu0 0.0
    %145 = vmatpush2.msra.mxu0 0.0
    %146 = vmatprep.mubr.f32.mxu0 0.0
    %147 = vmatmul.mubr.f32.gmra.mxu0 %v80
    %v148 = vpop.f32.mrf.mxu0
    %v149 = vadd.f32 0.0, %v148
    %v150 = vpop.f32.mrf.mxu0
    %151 = vdwg.mxu0
    %vm152 = vcmask 261120
    %v154 = vsel %vm152, %v72, 0
    %156 = vmatprep.subr.mxu0 0.0
    %157 = vmatpush1.msra.mxu0 0.0
    %158 = vmatprep.subr.mxu0 0.0
    %159 = vmatpush1.msra.mxu0 0.0
    %160 = vmatprep.subr.mxu0 0.0
    %161 = vmatpush1.msra.mxu0 0.0
    %162 = vmatprep.subr.mxu0 0.0
    %163 = vmatpush1.msra.mxu0 0.0
    %164 = vmatprep.subr.mxu0 0.0
    %165 = vmatpush1.msra.mxu0 0.0
    %166 = vmatprep.subr.mxu0 0.0
    %167 = vmatpush1.msra.mxu0 0.0
    %168 = vmatprep.subr.mxu0 0.0
    %169 = vmatpush1.msra.mxu0 0.0
    %170 = vmatprep.subr.mxu0 0.0
    %171 = vmatpush1.msra.mxu0 0.0
    %172 = vmatprep.subr.mxu0 0.0
    %173 = vmatpush1.msra.mxu0 0.0
    %174 = vmatprep.subr.mxu0 0.0
    %175 = vmatpush1.msra.mxu0 0.0
    %176 = vmatprep.subr.mxu0 0.0
    %177 = vmatpush1.msra.mxu0 0.0
    %178 = vmatprep.subr.mxu0 0.0
    %179 = vmatpush1.msra.mxu0 0.0
    %180 = vmatprep.subr.mxu0 0.0
    %181 = vmatpush1.msra.mxu0 %v76
    %182 = vmatprep.subr.mxu0 0.0
    %183 = vmatpush1.msra.mxu0 %v75
    %184 = vmatprep.subr.mxu0 0.0
    %185 = vmatpush1.msra.mxu0 %v74
    %186 = vmatprep.subr.mxu0 0.0
    %187 = vmatpush1.msra.mxu0 %v73
    %188 = vmatprep.subr.mxu0 0.0
    %189 = vmatpush2.msra.mxu0 0.0
    %190 = vmatprep.subr.mxu0 0.0
    %191 = vmatpush2.msra.mxu0 0.0
    %192 = vmatprep.subr.mxu0 0.0
    %193 = vmatpush2.msra.mxu0 0.0
    %194 = vmatprep.subr.mxu0 0.0
    %195 = vmatpush2.msra.mxu0 0.0
    %196 = vmatprep.subr.mxu0 0.0
    %197 = vmatpush2.msra.mxu0 0.0
    %198 = vmatprep.subr.mxu0 0.0
    %199 = vmatpush2.msra.mxu0 0.0
    %200 = vmatprep.subr.mxu0 0.0
    %201 = vmatpush2.msra.mxu0 0.0
    %202 = vmatprep.subr.mxu0 0.0
    %203 = vmatpush2.msra.mxu0 0.0
    %204 = vmatprep.subr.mxu0 0.0
    %205 = vmatpush2.msra.mxu0 0.0
    %206 = vmatprep.subr.mxu0 0.0
    %207 = vmatpush2.msra.mxu0 0.0
    %208 = vmatprep.subr.mxu0 0.0
    %209 = vmatpush2.msra.mxu0 0.0
    %210 = vmatprep.subr.mxu0 0.0
    %211 = vmatpush2.msra.mxu0 0.0
    %212 = vmatprep.subr.mxu0 0.0
    %213 = vmatpush2.msra.mxu0 0.0
    %214 = vmatprep.subr.mxu0 0.0
    %215 = vmatpush2.msra.mxu0 0.0
    %216 = vmatprep.subr.mxu0 0.0
    %217 = vmatpush2.msra.mxu0 0.0
    %218 = vmatprep.subr.mxu0 0.0
    %219 = vmatpush2.msra.mxu0 0.0
    %220 = vmatprep.mubr.f32.mxu0 0.0
    %221 = vmatmul.mubr.f32.gmra.mxu0 %v154
    %v222 = vpop.f32.mrf.mxu0
    %v223 = vadd.f32 %v149, %v222
    %v224 = vpop.f32.mrf.mxu0
    %225 = vdwg.mxu0
    %v226 = vmax.f32 %v223, 0.0
    %v227 = vld [vmem:[#allocation7] sm:$0xff]
    %v228 = vld [vmem:[#allocation7 + $0x8] sm:$0xff]
    %v229 = vld [vmem:[#allocation7 + $0x10] sm:$0xff]
    %v230 = vld [vmem:[#allocation7 + $0x18] sm:$0xff]
    %v231 = vld [vmem:[#allocation7 + $0x20] sm:$0xff]
    %v232 = vld [vmem:[#allocation7 + $0x28] sm:$0xff]
    %v233 = vld [vmem:[#allocation7 + $0x30] sm:$0xff]
    %v234 = vld [vmem:[#allocation7 + $0x38] sm:$0xff]
    %v235 = vld [vmem:[#allocation7 + $0x40] sm:$0xff]
    %v236 = vld [vmem:[#allocation7 + $0x48] sm:$0xff]
    %v237 = vld [vmem:[#allocation7 + $0x50] sm:$0xff]
    %v238 = vld [vmem:[#allocation7 + $0x58] sm:$0xff]
    %v239 = vld [vmem:[#allocation7 + $0x60] sm:$0xff]
    %v240 = vld [vmem:[#allocation7 + $0x68] sm:$0xff]
    %v241 = vld [vmem:[#allocation7 + $0x70] sm:$0xff]
    %v242 = vld [vmem:[#allocation7 + $0x78] sm:$0xff]
    %v243 = vld [vmem:[%s5] sm:$0x1]
    %v245 = vlaneseq
    %v246 = vshrl.u32 %v245, 7
    %v247 = vsub.s32 0, %v246
    %v248 = vrot.slane %v243, %v247
    %250 = vmatprep.subr.mxu0 0.0
    %251 = vmatpush1.msra.mxu0 %v242
    %252 = vmatprep.subr.mxu0 0.0
    %253 = vmatpush1.msra.mxu0 %v241
    %254 = vmatprep.subr.mxu0 0.0
    %255 = vmatpush1.msra.mxu0 %v240
    %256 = vmatprep.subr.mxu0 0.0
    %257 = vmatpush1.msra.mxu0 %v239
    %258 = vmatprep.subr.mxu0 0.0
    %259 = vmatpush1.msra.mxu0 %v238
    %260 = vmatprep.subr.mxu0 0.0
    %261 = vmatpush1.msra.mxu0 %v237
    %262 = vmatprep.subr.mxu0 0.0
    %263 = vmatpush1.msra.mxu0 %v236
    %264 = vmatprep.subr.mxu0 0.0
    %265 = vmatpush1.msra.mxu0 %v235
    %266 = vmatprep.subr.mxu0 0.0
    %267 = vmatpush1.msra.mxu0 %v234
    %268 = vmatprep.subr.mxu0 0.0
    %269 = vmatpush1.msra.mxu0 %v233
    %270 = vmatprep.subr.mxu0 0.0
    %271 = vmatpush1.msra.mxu0 %v232
    %272 = vmatprep.subr.mxu0 0.0
    %273 = vmatpush1.msra.mxu0 %v231
    %274 = vmatprep.subr.mxu0 0.0
    %275 = vmatpush1.msra.mxu0 %v230
    %276 = vmatprep.subr.mxu0 0.0
    %277 = vmatpush1.msra.mxu0 %v229
    %278 = vmatprep.subr.mxu0 0.0
    %279 = vmatpush1.msra.mxu0 %v228
    %280 = vmatprep.subr.mxu0 0.0
    %281 = vmatpush1.msra.mxu0 %v227
    %282 = vmatprep.subr.mxu0 0.0
    %283 = vmatpush2.msra.mxu0 0.0
    %284 = vmatprep.subr.mxu0 0.0
    %285 = vmatpush2.msra.mxu0 0.0
    %286 = vmatprep.subr.mxu0 0.0
    %287 = vmatpush2.msra.mxu0 0.0
    %288 = vmatprep.subr.mxu0 0.0
    %289 = vmatpush2.msra.mxu0 0.0
    %290 = vmatprep.subr.mxu0 0.0
    %291 = vmatpush2.msra.mxu0 0.0
    %292 = vmatprep.subr.mxu0 0.0
    %293 = vmatpush2.msra.mxu0 0.0
    %294 = vmatprep.subr.mxu0 0.0
    %295 = vmatpush2.msra.mxu0 0.0
    %296 = vmatprep.subr.mxu0 0.0
    %297 = vmatpush2.msra.mxu0 0.0
    %298 = vmatprep.subr.mxu0 0.0
    %299 = vmatpush2.msra.mxu0 0.0
    %300 = vmatprep.subr.mxu0 0.0
    %301 = vmatpush2.msra.mxu0 0.0
    %302 = vmatprep.subr.mxu0 0.0
    %303 = vmatpush2.msra.mxu0 0.0
    %304 = vmatprep.subr.mxu0 0.0
    %305 = vmatpush2.msra.mxu0 0.0
    %306 = vmatprep.subr.mxu0 0.0
    %307 = vmatpush2.msra.mxu0 0.0
    %308 = vmatprep.subr.mxu0 0.0
    %309 = vmatpush2.msra.mxu0 0.0
    %310 = vmatprep.subr.mxu0 0.0
    %311 = vmatpush2.msra.mxu0 0.0
    %312 = vmatprep.subr.mxu0 0.0
    %313 = vmatpush2.msra.mxu0 0.0
    %314 = vmatprep.mubr.f32.mxu0 0.0
    %315 = vmatmul.mubr.f32.gmra.mxu0 %v226
    %v316 = vpop.f32.mrf.mxu0
    %v317 = vadd.f32 %v248, %v316
    %v318 = vpop.f32.mrf.mxu0
    %319 = vdwg.mxu0
    %v320 = vtanh.pop %v317
    %321 = vst [vmem:[#allocation8] sm:$0xff] %v320
    // Predicated region
    $region38: #{tpu_custom_call.1} parent=1 // pred_check
      _
    $region39: #{tpu_custom_call.1} parent=1 // pred_check_branch
      %323 = sbr.rel (0) target = $region41
    $region40: #{tpu_custom_call.1} parent=1 // pred_region
      %s325 = ssub.s32 128, 128
      %326 = vsyncadd [#allocation4], %s325
      %s328 = sshll.u32 [#allocation8], 4
      %s329 = int_to_ptr.vmem [resolvable:$true] %s328
      %331 = dma.vmem_to_hbm [thread:$0]  %s329, 128, %s6, [#allocation4]
    $region41: #{tpu_custom_call.1} parent=1 // pred_fallthru
      _
    // Predicated region
    $region42: #{tpu_custom_call.1} parent=1 // pred_check
      _
    $region43: #{tpu_custom_call.1} parent=1 // pred_check_branch
      %333 = sbr.rel (0) target = $region45
    $region44: #{tpu_custom_call.1} parent=1 // pred_region
      %334 = dma.done [#allocation4], 128
    $region45: #{tpu_custom_call.1} parent=1 // pred_fallthru
      _
    %335 = vsyncpa [#allocation3], 1
    %336 = vsyncpa [#allocation6], 1
    %337 = vsyncpa [#allocation4], 1

</llo_original>
